<compile_context>
chip_gen: v6e
topology: v6e:2x2x1
jax: 0.10.0
libtpu: 0.0.40
codegen_flags: <defaults>
</compile_context>

<pallas_src>
import functools

import jax
import jax.numpy as jnp
from jax.experimental import pallas as pl
from jax.experimental.pallas import tpu as pltpu


def _round_up(a, b):
    return (a + b - 1) // b * b


def _backbone_fc_kernel(x_ref, w1_ref, w2_ref, w3_ref, c_ref, o_ref,
                        *, h_real, h_pad):
    # One row tile; three matmuls + relu + layernorm fused in VMEM.
    x = x_ref[...].astype(jnp.bfloat16)                       # cast in-kernel
    c = c_ref[...]                                            # (8, h_pad) f32
    b1, b2, b3 = c[0:1, :], c[1:2, :], c[2:3, :]
    gamma, beta = c[3:4, :], c[4:5, :]

    # linear1 (dropout == identity in eval mode); f32 accumulation on MXU.
    h = jnp.dot(x, w1_ref[...], preferred_element_type=jnp.float32) + b1
    # linear2 -> relu
    h = jnp.dot(h.astype(jnp.bfloat16), w2_ref[...],
                preferred_element_type=jnp.float32) + b2
    h = jnp.maximum(h, 0.0)
    # dropout == identity, linear3
    h = jnp.dot(h.astype(jnp.bfloat16), w3_ref[...],
                preferred_element_type=jnp.float32) + b3

    # Centered (two-pass) LayerNorm over the *real* hidden width.  Padded
    # lanes of h are exactly zero (weights/biases were zero-padded), so the
    # mean over all lanes equals the mean over the real lanes; padded lanes
    # are masked out of the variance.
    inv_h = jnp.float32(1.0 / h_real)
    mean = jnp.sum(h, axis=-1, keepdims=True) * inv_h
    d = h - mean
    if h_real != h_pad:
        lane = jax.lax.broadcasted_iota(jnp.int32, (1, h_pad), 1)
        d = jnp.where(lane < h_real, d, 0.0)
    var = jnp.sum(d * d, axis=-1, keepdims=True) * inv_h
    y = d * jax.lax.rsqrt(var + 1e-5) * gamma + beta          # eps = nn.LayerNorm default

    o_ref[...] = y.astype(o_ref.dtype)


def prepare_params(params):
    """One-time parameter prep (hoisted out of the per-call forward):
    bf16 (in,out) weights padded to 128-lane-dense shapes, and a single packed
    (8, h_pad) f32 constant holding b1/b2/b3/gamma/beta."""
    w1, b1, w2, b2, w3, b3, gamma, beta = params
    d_in, h = w1.shape
    d_pad = _round_up(d_in, 128)
    h_pad = _round_up(h, 128)

    def pad_w(w, rows, cols):
        w = w.astype(jnp.bfloat16)
        return jnp.pad(w, ((0, rows - w.shape[0]), (0, cols - w.shape[1])))

    w1p = pad_w(w1, d_pad, h_pad)
    w2p = pad_w(w2, h_pad, h_pad)
    w3p = pad_w(w3, h_pad, h_pad)

    consts = jnp.zeros((8, h_pad), jnp.float32)
    for row, v in enumerate((b1, b2, b3, gamma, beta)):
        consts = consts.at[row, :h].set(v.astype(jnp.float32))

    return dict(w1=w1p, w2=w2p, w3=w3p, consts=consts,
                d_in=d_in, d_pad=d_pad, h=h, h_pad=h_pad)


def layer_backbone_fc(x, prepared, *, tile_m=256, out_dtype=jnp.float32):
    """x: (B, S, input_dim) float32. Returns (B, S, hidden_dim) in out_dtype.
    `prepared` comes from prepare_params().  Pass out_dtype=jnp.bfloat16 to
    halve output HBM writeback (worth it on v5e) when the consumer accepts it.
    """
    w1p, w2p, w3p = prepared["w1"], prepared["w2"], prepared["w3"]
    consts = prepared["consts"]
    d_in, d_pad = prepared["d_in"], prepared["d_pad"]
    h, h_pad = prepared["h"], prepared["h_pad"]

    B, S, xd = x.shape
    assert xd == d_in, "input_dim mismatch with prepared params"
    M = B * S

    # Row tile: 16-aligned (bf16 sublane packing), large enough to amortize
    # the ~0.35us/step pipeline overhead, and split into >=2 tiles when
    # possible so v7x's two TensorCores both get work.
    tile_m = _round_up(max(min(tile_m, -(-M // 2)), 16), 16)
    m_pad = _round_up(M, tile_m)
    grid_m = m_pad // tile_m

    x2d = x.reshape(M, d_in)
    if m_pad != M or d_pad != d_in:          # pad only when actually unaligned
        x2d = jnp.pad(x2d, ((0, m_pad - M), (0, d_pad - d_in)))

    out_bytes = jnp.dtype(out_dtype).itemsize

    # VMEM budget from the actual footprint (+headroom), capped below v7x's
    # 64 MiB/TC.  Inputs/outputs double-buffer by default.
    bytes_w = (w1p.size + w2p.size + w3p.size) * 2
    bytes_c = consts.size * 4
    bytes_x = tile_m * d_pad * 4
    bytes_o = tile_m * h_pad * out_bytes
    temps = tile_m * h_pad * (3 * 4 + 2)
    vmem_needed = 2 * (bytes_w + bytes_c + bytes_x + bytes_o) + temps
    vmem_limit = min(max(int(1.5 * vmem_needed) + (4 << 20), 32 << 20), 56 << 20)

    flops = int(2 * m_pad * (d_pad * h_pad + 2 * h_pad * h_pad)
                + 12 * m_pad * h_pad)
    bytes_accessed = int(m_pad * d_pad * 4 + bytes_w + bytes_c
                         + m_pad * h_pad * out_bytes)

    kernel = functools.partial(_backbone_fc_kernel, h_real=h, h_pad=h_pad)

    out2d = pl.pallas_call(
        kernel,
        out_shape=jax.ShapeDtypeStruct((m_pad, h_pad), out_dtype),
        grid_spec=pl.GridSpec(
            grid=(grid_m,),
            in_specs=[
                pl.BlockSpec((tile_m, d_pad), lambda i: (i, 0)),   # x row tile (f32)
                pl.BlockSpec((d_pad, h_pad), lambda i: (0, 0)),    # W1 (in,out) bf16
                pl.BlockSpec((h_pad, h_pad), lambda i: (0, 0)),    # W2
                pl.BlockSpec((h_pad, h_pad), lambda i: (0, 0)),    # W3
                pl.BlockSpec((8, h_pad), lambda i: (0, 0)),        # packed b1/b2/b3/gamma/beta
            ],
            out_specs=pl.BlockSpec((tile_m, h_pad), lambda i: (i, 0)),
        ),
        compiler_params=pltpu.CompilerParams(
            dimension_semantics=("parallel",),
            vmem_limit_bytes=vmem_limit,
        ),
        cost_estimate=pl.CostEstimate(
            flops=flops, transcendentals=m_pad,
            bytes_accessed=bytes_accessed),
    )(x2d, w1p, w2p, w3p, consts)

    if m_pad != M or h_pad != h:             # slice only when padding was added
        out2d = out2d[:M, :h]
    return out2d.reshape(B, S, h)


def init_params(key, input_dim, hidden_dim):
    """Deterministic synthetic parameters matching nn.Linear / nn.LayerNorm.
    Linear weights are stored transposed: (in_features, out_features)."""
    ks = jax.random.split(key, 6)
    s1 = 1.0 / jnp.sqrt(input_dim)
    s2 = 1.0 / jnp.sqrt(hidden_dim)
    w1 = jax.random.uniform(ks[0], (input_dim, hidden_dim), jnp.float32, -s1, s1)
    b1 = jax.random.uniform(ks[1], (hidden_dim,), jnp.float32, -s1, s1)
    w2 = jax.random.uniform(ks[2], (hidden_dim, hidden_dim), jnp.float32, -s2, s2)
    b2 = jax.random.uniform(ks[3], (hidden_dim,), jnp.float32, -s2, s2)
    w3 = jax.random.uniform(ks[4], (hidden_dim, hidden_dim), jnp.float32, -s2, s2)
    b3 = jax.random.uniform(ks[5], (hidden_dim,), jnp.float32, -s2, s2)
    gamma = jnp.ones((hidden_dim,), jnp.float32)   # nn.LayerNorm init
    beta = jnp.zeros((hidden_dim,), jnp.float32)
    return (w1, b1, w2, b2, w3, b3, gamma, beta)


def _reference(x, params):
    w1, b1, w2, b2, w3, b3, gamma, beta = params
    h = x @ w1 + b1
    h = jnp.maximum(h @ w2 + b2, 0.0)
    h = h @ w3 + b3
    mean = jnp.mean(h, axis=-1, keepdims=True)
    var = jnp.mean((h - mean) ** 2, axis=-1, keepdims=True)
    return (h - mean) * jax.lax.rsqrt(var + 1e-5) * gamma + beta


if __name__ == "__main__":
    B, S, INPUT_DIM, HIDDEN_DIM = 2, 8, 16, 32

    key = jax.random.PRNGKey(0)
    kx, kp = jax.random.split(key)
    x = jax.random.normal(kx, (B, S, INPUT_DIM), jnp.float32)
    params = init_params(kp, INPUT_DIM, HIDDEN_DIM)

    prepared = prepare_params(params)          # one-time weight prep (hoisted)
    out = layer_backbone_fc(x, prepared)
    out = jax.block_until_ready(out)

    ref = _reference(x, params)
    assert out.shape == (B, S, HIDDEN_DIM)
    # bf16 matmuls with f32 accumulation: loosened tolerance vs f32 reference.
    assert jnp.allclose(out, ref, atol=3e-2, rtol=3e-2), "mismatch vs JAX reference"

    print("KERNEL_OK")
</pallas_src>

<mosaic_0001>
module attributes {stable_mosaic.version = 11 : i64} {
  func.func @_backbone_fc_kernel(%arg0: i32, %arg1: memref<16x128xf32, #tpu.memory_space<vmem>>, %arg2: memref<128x128xbf16, #tpu.memory_space<vmem>>, %arg3: memref<128x128xbf16, #tpu.memory_space<vmem>>, %arg4: memref<128x128xbf16, #tpu.memory_space<vmem>>, %arg5: memref<8x128xf32, #tpu.memory_space<vmem>>, %arg6: memref<16x128xf32, #tpu.memory_space<vmem>>) attributes {dimension_semantics = [#tpu.dimension_semantics<parallel>], iteration_bounds = array<i64: 1>, scalar_prefetch = 0 : i64, scratch_operands = 0 : i64, tpu.core_type = #tpu.core_type<tc>, window_params = [{transform_indices = @transform_0, window_bounds = array<i64: 16, 128>}, {pipeline_mode = #tpu.pipeline_mode<synchronous>, transform_indices = @transform_1, window_bounds = array<i64: 128, 128>}, {pipeline_mode = #tpu.pipeline_mode<synchronous>, transform_indices = @transform_2, window_bounds = array<i64: 128, 128>}, {pipeline_mode = #tpu.pipeline_mode<synchronous>, transform_indices = @transform_3, window_bounds = array<i64: 128, 128>}, {pipeline_mode = #tpu.pipeline_mode<synchronous>, transform_indices = @transform_4, window_bounds = array<i64: 8, 128>}, {transform_indices = @transform_5, window_bounds = array<i64: 16, 128>}]} {
    %c0 = arith.constant 0 : index
    %c0_0 = arith.constant 0 : index
    %0 = vector.load %arg1[%c0, %c0_0] : memref<16x128xf32, #tpu.memory_space<vmem>>, vector<16x128xf32>
    %1 = arith.truncf %0 : vector<16x128xf32> to vector<16x128xbf16>
    %c0_1 = arith.constant 0 : index
    %c0_2 = arith.constant 0 : index
    %2 = vector.load %arg5[%c0_1, %c0_2] : memref<8x128xf32, #tpu.memory_space<vmem>>, vector<8x128xf32>
    %3 = vector.extract_strided_slice %2 {offsets = [0, 0], sizes = [1, 128], strides = [1, 1]} : vector<8x128xf32> to vector<1x128xf32>
    %4 = vector.extract_strided_slice %2 {offsets = [1, 0], sizes = [1, 128], strides = [1, 1]} : vector<8x128xf32> to vector<1x128xf32>
    %5 = vector.extract_strided_slice %2 {offsets = [2, 0], sizes = [1, 128], strides = [1, 1]} : vector<8x128xf32> to vector<1x128xf32>
    %6 = vector.extract_strided_slice %2 {offsets = [3, 0], sizes = [1, 128], strides = [1, 1]} : vector<8x128xf32> to vector<1x128xf32>
    %7 = vector.extract_strided_slice %2 {offsets = [4, 0], sizes = [1, 128], strides = [1, 1]} : vector<8x128xf32> to vector<1x128xf32>
    %c0_3 = arith.constant 0 : index
    %c0_4 = arith.constant 0 : index
    %8 = vector.load %arg2[%c0_3, %c0_4] : memref<128x128xbf16, #tpu.memory_space<vmem>>, vector<128x128xbf16>
    %cst = arith.constant dense<0.000000e+00> : vector<16x128xf32>
    %9 = tpu.matmul %1, %8, %cst {dimension_numbers = #tpu.dot_dimension_numbers<[1], [0], [0], [1], [0, 0, 1, 1], [], []>} : vector<16x128xbf16>, vector<128x128xbf16>, vector<16x128xf32> -> vector<16x128xf32>
    %10 = vector.broadcast %3 : vector<1x128xf32> to vector<16x128xf32>
    %11 = arith.addf %9, %10 : vector<16x128xf32>
    %12 = arith.truncf %11 : vector<16x128xf32> to vector<16x128xbf16>
    %c0_5 = arith.constant 0 : index
    %c0_6 = arith.constant 0 : index
    %13 = vector.load %arg3[%c0_5, %c0_6] : memref<128x128xbf16, #tpu.memory_space<vmem>>, vector<128x128xbf16>
    %cst_7 = arith.constant dense<0.000000e+00> : vector<16x128xf32>
    %14 = tpu.matmul %12, %13, %cst_7 {dimension_numbers = #tpu.dot_dimension_numbers<[1], [0], [0], [1], [0, 0, 1, 1], [], []>} : vector<16x128xbf16>, vector<128x128xbf16>, vector<16x128xf32> -> vector<16x128xf32>
    %15 = vector.broadcast %4 : vector<1x128xf32> to vector<16x128xf32>
    %16 = arith.addf %14, %15 : vector<16x128xf32>
    %cst_8 = arith.constant 0.000000e+00 : f32
    %17 = vector.broadcast %cst_8 : f32 to vector<16x128xf32>
    %18 = arith.maximumf %16, %17 : vector<16x128xf32>
    %19 = arith.truncf %18 : vector<16x128xf32> to vector<16x128xbf16>
    %c0_9 = arith.constant 0 : index
    %c0_10 = arith.constant 0 : index
    %20 = vector.load %arg4[%c0_9, %c0_10] : memref<128x128xbf16, #tpu.memory_space<vmem>>, vector<128x128xbf16>
    %cst_11 = arith.constant dense<0.000000e+00> : vector<16x128xf32>
    %21 = tpu.matmul %19, %20, %cst_11 {dimension_numbers = #tpu.dot_dimension_numbers<[1], [0], [0], [1], [0, 0, 1, 1], [], []>} : vector<16x128xbf16>, vector<128x128xbf16>, vector<16x128xf32> -> vector<16x128xf32>
    %22 = vector.broadcast %5 : vector<1x128xf32> to vector<16x128xf32>
    %23 = arith.addf %21, %22 : vector<16x128xf32>
    %cst_12 = arith.constant dense<0.000000e+00> : vector<16xf32>
    %24 = vector.multi_reduction <add>, %23, %cst_12 [1] : vector<16x128xf32> to vector<16xf32>
    %25 = vector.shape_cast %24 : vector<16xf32> to vector<16x1xf32>
    %cst_13 = arith.constant 3.125000e-02 : f32
    %26 = vector.broadcast %cst_13 : f32 to vector<16x1xf32>
    %27 = arith.mulf %25, %26 : vector<16x1xf32>
    %28 = vector.broadcast %27 : vector<16x1xf32> to vector<16x128xf32>
    %29 = arith.subf %23, %28 : vector<16x128xf32>
    %30 = tpu.iota {dimensions = array<i32: 1>} : vector<1x128xi32>
    %c32_i32 = arith.constant 32 : i32
    %31 = vector.broadcast %c32_i32 : i32 to vector<1x128xi32>
    %32 = arith.cmpi slt, %30, %31 : vector<1x128xi32>
    %cst_14 = arith.constant 0.000000e+00 : f32
    %33 = vector.shape_cast %32 : vector<1x128xi1> to vector<1x128xi1>
    %34 = vector.broadcast %33 : vector<1x128xi1> to vector<16x128xi1>
    %35 = vector.broadcast %cst_14 : f32 to vector<16x128xf32>
    %36 = arith.select %34, %29, %35 : vector<16x128xi1>, vector<16x128xf32>
    %37 = arith.mulf %36, %36 : vector<16x128xf32>
    %cst_15 = arith.constant dense<0.000000e+00> : vector<16xf32>
    %38 = vector.multi_reduction <add>, %37, %cst_15 [1] : vector<16x128xf32> to vector<16xf32>
    %39 = vector.shape_cast %38 : vector<16xf32> to vector<16x1xf32>
    %cst_16 = arith.constant 3.125000e-02 : f32
    %40 = vector.broadcast %cst_16 : f32 to vector<16x1xf32>
    %41 = arith.mulf %39, %40 : vector<16x1xf32>
    %cst_17 = arith.constant 9.99999974E-6 : f32
    %42 = vector.broadcast %cst_17 : f32 to vector<16x1xf32>
    %43 = arith.addf %41, %42 : vector<16x1xf32>
    %44 = math.rsqrt %43 : vector<16x1xf32>
    %45 = vector.broadcast %44 : vector<16x1xf32> to vector<16x128xf32>
    %46 = arith.mulf %36, %45 : vector<16x128xf32>
    %47 = vector.broadcast %6 : vector<1x128xf32> to vector<16x128xf32>
    %48 = arith.mulf %46, %47 : vector<16x128xf32>
    %49 = vector.broadcast %7 : vector<1x128xf32> to vector<16x128xf32>
    %50 = arith.addf %48, %49 : vector<16x128xf32>
    %c0_18 = arith.constant 0 : index
    %c0_19 = arith.constant 0 : index
    %51 = vector.load %arg6[%c0_18, %c0_19] : memref<16x128xf32, #tpu.memory_space<vmem>>, vector<16x128xf32>
    tpu.vector_store %arg6[%c0_18, %c0_19], %50 {strides = array<i32>} : memref<16x128xf32, #tpu.memory_space<vmem>>, vector<16x128xf32>,
    return
  }
  func.func @transform_0(%arg0: i32) -> (i32, i32) {
    %c0_i32 = arith.constant 0 : i32
    %c0_i32_0 = arith.constant 0 : i32
    return %arg0, %c0_i32 : i32, i32
  }
  func.func @transform_1(%arg0: i32) -> (i32, i32) {
    %c0_i32 = arith.constant 0 : i32
    %c0_i32_0 = arith.constant 0 : i32
    %c0_i32_1 = arith.constant 0 : i32
    return %c0_i32, %c0_i32_0 : i32, i32
  }
  func.func @transform_2(%arg0: i32) -> (i32, i32) {
    %c0_i32 = arith.constant 0 : i32
    %c0_i32_0 = arith.constant 0 : i32
    %c0_i32_1 = arith.constant 0 : i32
    return %c0_i32, %c0_i32_0 : i32, i32
  }
  func.func @transform_3(%arg0: i32) -> (i32, i32) {
    %c0_i32 = arith.constant 0 : i32
    %c0_i32_0 = arith.constant 0 : i32
    %c0_i32_1 = arith.constant 0 : i32
    return %c0_i32, %c0_i32_0 : i32, i32
  }
  func.func @transform_4(%arg0: i32) -> (i32, i32) {
    %c0_i32 = arith.constant 0 : i32
    %c0_i32_0 = arith.constant 0 : i32
    %c0_i32_1 = arith.constant 0 : i32
    return %c0_i32, %c0_i32_0 : i32, i32
  }
  func.func @transform_5(%arg0: i32) -> (i32, i32) {
    %c0_i32 = arith.constant 0 : i32
    %c0_i32_0 = arith.constant 0 : i32
    return %arg0, %c0_i32 : i32, i32
  }
}

</mosaic_0001>

<llo_original>
// kernel: tpu_custom_call.1
$region0: #{tpu_custom_call.1}
  #allocation0 [shape = 'u32[]', space=smem, size = 0x4, offset = 0x4, fixed_abs, tag = 'smem constant byte address 0x4 - core index']
  #allocation1 [shape = 'u32[144,128]{1,0:T(1,128)}', space=vmem, size = 0x12000, scoped, tag = 'internal scratch']
  %s0 = inlined_call_operand.hbm [shape: f32[16,128], index: 0, kind: input, shape index: {}]
  %s1 = inlined_call_operand.hbm [shape: bf16[128,128], index: 1, kind: input, shape index: {}]
  %s2 = inlined_call_operand.hbm [shape: bf16[128,128], index: 2, kind: input, shape index: {}]
  %s3 = inlined_call_operand.hbm [shape: bf16[128,128], index: 3, kind: input, shape index: {}]
  %s4 = inlined_call_operand.hbm [shape: f32[8,128], index: 4, kind: input, shape index: {}]
  %s5 = inlined_call_operand.hbm [shape: f32[16,128], index: 5, kind: output, shape index: {}]
  %s6 = sld [smem:[#allocation0]]
  $region50: #{tpu_custom_call.1} parent=0
    _
  %s8 = ssub.s32 1, %s6
  %s9 = scalar_select 0, %s8, %s6
  $region1: #{tpu_custom_call.1} parent=0
    #allocation2 [shape = 'u8[8192]{0}', space=vmem, size = 0x2000, scoped, tag = 'input window, operand 0, single buffered']
    #allocation3 [shape = 's32[1]{0}', space=sflag, size = 0x4, scoped, tag = 'scoped memory for tpu_custom_call.1']
    #allocation4 [shape = 's32[1]{0}', space=sflag, size = 0x4, scoped, tag = 'scoped memory for tpu_custom_call.1']
    #allocation5 [shape = 'u8[32768]{0}', space=vmem, size = 0x8000, scoped, tag = 'input window, operand 1, single buffered']
    #allocation6 [shape = 's32[1]{0}', space=sflag, size = 0x4, scoped, tag = 'scoped memory for tpu_custom_call.1']
    #allocation7 [shape = 'u8[32768]{0}', space=vmem, size = 0x8000, scoped, tag = 'input window, operand 2, single buffered']
    #allocation8 [shape = 'u8[32768]{0}', space=vmem, size = 0x8000, scoped, tag = 'input window, operand 3, single buffered']
    #allocation9 [shape = 's32[1]{0}', space=sflag, size = 0x4, scoped, tag = 'scoped memory for tpu_custom_call.1']
    #allocation10 [shape = 'u8[4096]{0}', space=vmem, size = 0x1000, scoped, tag = 'input window, operand 4, single buffered']
    #allocation11 [shape = 'u8[8192]{0}', space=vmem, size = 0x2000, scoped, tag = 'output window, operand 0, single buffered']
    %10 = vsyncpa [#allocation3], 0
    %11 = vsyncpa [#allocation6], 0
    %12 = vsyncpa [#allocation9], 0
    %13 = vsyncpa [#allocation4], 0
    // Predicated region
    $region2: #{tpu_custom_call.1} parent=1 // pred_check
      _
    $region3: #{tpu_custom_call.1} parent=1 // pred_check_branch
      %15 = sbr.rel (0) target = $region5
    $region4: #{tpu_custom_call.1} parent=1 // pred_region
      %s17 = ssub.s32 256, 256
      %18 = vsyncadd [#allocation3], %s17
      %s19 = sshll.u32 [#allocation2], 4
      %s20 = int_to_ptr.vmem [resolvable:$true] %s19
      %25 = dma.hbm_to_vmem [thread:$0]  %s0, 256, %s20, [#allocation3], 128, 128, 8
    $region5: #{tpu_custom_call.1} parent=1 // pred_fallthru
      _
    // Predicated region
    $region6: #{tpu_custom_call.1} parent=1 // pred_check
      _
    $region7: #{tpu_custom_call.1} parent=1 // pred_check_branch
      %27 = sbr.rel (0) target = $region9
    $region8: #{tpu_custom_call.1} parent=1 // pred_region
      %s29 = ssub.s32 1024, 1024
      %30 = vsyncadd [#allocation6], %s29
      %s31 = sshll.u32 [#allocation5], 4
      %s32 = int_to_ptr.vmem [resolvable:$true] %s31
      %37 = dma.hbm_to_vmem [thread:$0]  %s1, 1024, %s32, [#allocation6], 64, 64, 4
    $region9: #{tpu_custom_call.1} parent=1 // pred_fallthru
      _
    // Predicated region
    $region10: #{tpu_custom_call.1} parent=1 // pred_check
      _
    $region11: #{tpu_custom_call.1} parent=1 // pred_check_branch
      %39 = sbr.rel (0) target = $region13
    $region12: #{tpu_custom_call.1} parent=1 // pred_region
      %s41 = ssub.s32 1024, 1024
      %42 = vsyncadd [#allocation6], %s41
      %s43 = sshll.u32 [#allocation7], 4
      %s44 = int_to_ptr.vmem [resolvable:$true] %s43
      %49 = dma.hbm_to_vmem [thread:$0]  %s2, 1024, %s44, [#allocation6], 64, 64, 4
    $region13: #{tpu_custom_call.1} parent=1 // pred_fallthru
      _
    // Predicated region
    $region14: #{tpu_custom_call.1} parent=1 // pred_check
      _
    $region15: #{tpu_custom_call.1} parent=1 // pred_check_branch
      %51 = sbr.rel (0) target = $region17
    $region16: #{tpu_custom_call.1} parent=1 // pred_region
      %s53 = ssub.s32 1024, 1024
      %54 = vsyncadd [#allocation9], %s53
      %s55 = sshll.u32 [#allocation8], 4
      %s56 = int_to_ptr.vmem [resolvable:$true] %s55
      %61 = dma.hbm_to_vmem [thread:$0]  %s3, 1024, %s56, [#allocation9], 64, 64, 4
    $region17: #{tpu_custom_call.1} parent=1 // pred_fallthru
      _
    // Predicated region
    $region18: #{tpu_custom_call.1} parent=1 // pred_check
      _
    $region19: #{tpu_custom_call.1} parent=1 // pred_check_branch
      %63 = sbr.rel (0) target = $region21
    $region20: #{tpu_custom_call.1} parent=1 // pred_region
      %s65 = ssub.s32 128, 128
      %66 = vsyncadd [#allocation9], %s65
      %s68 = sshll.u32 [#allocation10], 4
      %s69 = int_to_ptr.vmem [resolvable:$true] %s68
      %71 = dma.hbm_to_vmem [thread:$0]  %s4, 128, %s69, [#allocation9]
    $region21: #{tpu_custom_call.1} parent=1 // pred_fallthru
      _
    // Predicated region
    $region22: #{tpu_custom_call.1} parent=1 // pred_check
      _
    $region23: #{tpu_custom_call.1} parent=1 // pred_check_branch
      %73 = sbr.rel (0) target = $region25
    $region24: #{tpu_custom_call.1} parent=1 // pred_region
      %74 = dma.done [#allocation3], 256
    $region25: #{tpu_custom_call.1} parent=1 // pred_fallthru
      _
    // Predicated region
    $region26: #{tpu_custom_call.1} parent=1 // pred_check
      _
    $region27: #{tpu_custom_call.1} parent=1 // pred_check_branch
      %76 = sbr.rel (0) target = $region29
    $region28: #{tpu_custom_call.1} parent=1 // pred_region
      %77 = dma.done [#allocation6], 1024
    $region29: #{tpu_custom_call.1} parent=1 // pred_fallthru
      _
    // Predicated region
    $region30: #{tpu_custom_call.1} parent=1 // pred_check
      _
    $region31: #{tpu_custom_call.1} parent=1 // pred_check_branch
      %79 = sbr.rel (0) target = $region33
    $region32: #{tpu_custom_call.1} parent=1 // pred_region
      %80 = dma.done [#allocation6], 1024
    $region33: #{tpu_custom_call.1} parent=1 // pred_fallthru
      _
    // Predicated region
    $region34: #{tpu_custom_call.1} parent=1 // pred_check
      _
    $region35: #{tpu_custom_call.1} parent=1 // pred_check_branch
      %82 = sbr.rel (0) target = $region37
    $region36: #{tpu_custom_call.1} parent=1 // pred_region
      %83 = dma.done [#allocation9], 1024
    $region37: #{tpu_custom_call.1} parent=1 // pred_fallthru
      _
    // Predicated region
    $region38: #{tpu_custom_call.1} parent=1 // pred_check
      _
    $region39: #{tpu_custom_call.1} parent=1 // pred_check_branch
      %85 = sbr.rel (0) target = $region41
    $region40: #{tpu_custom_call.1} parent=1 // pred_region
      %86 = dma.done [#allocation9], 128
    $region41: #{tpu_custom_call.1} parent=1 // pred_fallthru
      _
    %v88 = vld [vmem:[#allocation2] sm:$0xff]
    %v89 = vld [vmem:[#allocation2 + $0x8] sm:$0xff]
    %v90 = vpack.c.bf16 %v89, %v88
    %v91 = vld [vmem:[#allocation10] sm:$0xff]
    %v92 = vld [vmem:[#allocation5] sm:$0xf]
    %v93 = vld [vmem:[#allocation5 + $0x4] sm:$0xf]
    %v94 = vld [vmem:[#allocation5 + $0x8] sm:$0xf]
    %v95 = vld [vmem:[#allocation5 + $0xc] sm:$0xf]
    %v96 = vld [vmem:[#allocation5 + $0x10] sm:$0xf]
    %v97 = vld [vmem:[#allocation5 + $0x14] sm:$0xf]
    %v98 = vld [vmem:[#allocation5 + $0x18] sm:$0xf]
    %v99 = vld [vmem:[#allocation5 + $0x1c] sm:$0xf]
    %v100 = vld [vmem:[#allocation5 + $0x20] sm:$0xf]
    %v101 = vld [vmem:[#allocation5 + $0x24] sm:$0xf]
    %v102 = vld [vmem:[#allocation5 + $0x28] sm:$0xf]
    %v103 = vld [vmem:[#allocation5 + $0x2c] sm:$0xf]
    %v104 = vld [vmem:[#allocation5 + $0x30] sm:$0xf]
    %v105 = vld [vmem:[#allocation5 + $0x34] sm:$0xf]
    %v106 = vld [vmem:[#allocation5 + $0x38] sm:$0xf]
    %v107 = vld [vmem:[#allocation5 + $0x3c] sm:$0xf]
    %v108 = vlaneseq
    %v109 = vshrl.u32 %v108, 7
    %v110 = vsub.s32 0, %v109
    %v111 = vrot.slane %v91, %v110
    %v128 = vunpack.c.l.b16 %v92
    %v129 = vunpack.c.l.b16 %v93
    %v130 = vunpack.c.l.b16 %v94
    %v131 = vunpack.c.l.b16 %v95
    %v132 = vunpack.c.l.b16 %v96
    %v133 = vunpack.c.l.b16 %v97
    %v134 = vunpack.c.l.b16 %v98
    %v135 = vunpack.c.l.b16 %v99
    %v136 = vunpack.c.l.b16 %v100
    %v137 = vunpack.c.l.b16 %v101
    %v138 = vunpack.c.l.b16 %v102
    %v139 = vunpack.c.l.b16 %v103
    %v140 = vunpack.c.l.b16 %v104
    %v141 = vunpack.c.l.b16 %v105
    %v142 = vunpack.c.l.b16 %v106
    %v143 = vunpack.c.l.b16 %v107
    %v144 = vpack.c.b16 %v129, %v128
    %v145 = vpack.c.b16 %v131, %v130
    %v146 = vpack.c.b16 %v133, %v132
    %v147 = vpack.c.b16 %v135, %v134
    %v148 = vpack.c.b16 %v137, %v136
    %v149 = vpack.c.b16 %v139, %v138
    %v150 = vpack.c.b16 %v141, %v140
    %v151 = vpack.c.b16 %v143, %v142
    %160 = vmatprep.subr.bf16.mxu0 0
    %161 = vmatpush1.bf16.msra.mxu0 %v151
    %162 = vmatprep.subr.bf16.mxu0 0
    %163 = vmatpush1.bf16.msra.mxu0 %v150
    %164 = vmatprep.subr.bf16.mxu0 0
    %165 = vmatpush1.bf16.msra.mxu0 %v149
    %166 = vmatprep.subr.bf16.mxu0 0
    %167 = vmatpush1.bf16.msra.mxu0 %v148
    %168 = vmatprep.subr.bf16.mxu0 0
    %169 = vmatpush1.bf16.msra.mxu0 %v147
    %170 = vmatprep.subr.bf16.mxu0 0
    %171 = vmatpush1.bf16.msra.mxu0 %v146
    %172 = vmatprep.subr.bf16.mxu0 0
    %173 = vmatpush1.bf16.msra.mxu0 %v145
    %174 = vmatprep.subr.bf16.mxu0 0
    %175 = vmatpush1.bf16.msra.mxu0 %v144
    %176 = vmatprep.subr.bf16.mxu0 0
    %177 = vmatpush2.bf16.msra.mxu0 0
    %178 = vmatprep.subr.bf16.mxu0 0
    %179 = vmatpush2.bf16.msra.mxu0 0
    %180 = vmatprep.subr.bf16.mxu0 0
    %181 = vmatpush2.bf16.msra.mxu0 0
    %182 = vmatprep.subr.bf16.mxu0 0
    %183 = vmatpush2.bf16.msra.mxu0 0
    %184 = vmatprep.subr.bf16.mxu0 0
    %185 = vmatpush2.bf16.msra.mxu0 0
    %186 = vmatprep.subr.bf16.mxu0 0
    %187 = vmatpush2.bf16.msra.mxu0 0
    %188 = vmatprep.subr.bf16.mxu0 0
    %189 = vmatpush2.bf16.msra.mxu0 0
    %190 = vmatprep.subr.bf16.mxu0 0
    %191 = vmatpush2.bf16.msra.mxu0 0
    %192 = vmatprep.mubr.bf16.mxu0 0
    %193 = vmatmul.mubr.bf16.gmra.mxu0 %v90
    %v194 = vpop.f32.mrf.mxu0
    %v195 = vadd.f32 %v111, %v194
    %v196 = vpop.f32.mrf.mxu0
    %v197 = vpop.f32.mrf.mxu0
    %v198 = vadd.f32 %v111, %v197
    %v199 = vpop.f32.mrf.mxu0
    %200 = vdwg.mxu0
    %v201 = vpack.c.bf16 %v198, %v195
    %v202 = vld [vmem:[#allocation7] sm:$0xf]
    %v203 = vld [vmem:[#allocation7 + $0x4] sm:$0xf]
    %v204 = vld [vmem:[#allocation7 + $0x8] sm:$0xf]
    %v205 = vld [vmem:[#allocation7 + $0xc] sm:$0xf]
    %v206 = vld [vmem:[#allocation7 + $0x10] sm:$0xf]
    %v207 = vld [vmem:[#allocation7 + $0x14] sm:$0xf]
    %v208 = vld [vmem:[#allocation7 + $0x18] sm:$0xf]
    %v209 = vld [vmem:[#allocation7 + $0x1c] sm:$0xf]
    %v210 = vld [vmem:[#allocation7 + $0x20] sm:$0xf]
    %v211 = vld [vmem:[#allocation7 + $0x24] sm:$0xf]
    %v212 = vld [vmem:[#allocation7 + $0x28] sm:$0xf]
    %v213 = vld [vmem:[#allocation7 + $0x2c] sm:$0xf]
    %v214 = vld [vmem:[#allocation7 + $0x30] sm:$0xf]
    %v215 = vld [vmem:[#allocation7 + $0x34] sm:$0xf]
    %v216 = vld [vmem:[#allocation7 + $0x38] sm:$0xf]
    %v217 = vld [vmem:[#allocation7 + $0x3c] sm:$0xf]
    %v218 = vlaneseq
    %v219 = vshrl.u32 %v218, 7
    %v220 = vsub.s32 1, %v219
    %v221 = vrot.slane %v91, %v220
    %v238 = vunpack.c.l.b16 %v202
    %v239 = vunpack.c.l.b16 %v203
    %v240 = vunpack.c.l.b16 %v204
    %v241 = vunpack.c.l.b16 %v205
    %v242 = vunpack.c.l.b16 %v206
    %v243 = vunpack.c.l.b16 %v207
    %v244 = vunpack.c.l.b16 %v208
    %v245 = vunpack.c.l.b16 %v209
    %v246 = vunpack.c.l.b16 %v210
    %v247 = vunpack.c.l.b16 %v211
    %v248 = vunpack.c.l.b16 %v212
    %v249 = vunpack.c.l.b16 %v213
    %v250 = vunpack.c.l.b16 %v214
    %v251 = vunpack.c.l.b16 %v215
    %v252 = vunpack.c.l.b16 %v216
    %v253 = vunpack.c.l.b16 %v217
    %v254 = vpack.c.b16 %v239, %v238
    %v255 = vpack.c.b16 %v241, %v240
    %v256 = vpack.c.b16 %v243, %v242
    %v257 = vpack.c.b16 %v245, %v244
    %v258 = vpack.c.b16 %v247, %v246
    %v259 = vpack.c.b16 %v249, %v248
    %v260 = vpack.c.b16 %v251, %v250
    %v261 = vpack.c.b16 %v253, %v252
    %270 = vmatprep.subr.bf16.mxu0 0
    %271 = vmatpush1.bf16.msra.mxu0 %v261
    %272 = vmatprep.subr.bf16.mxu0 0
    %273 = vmatpush1.bf16.msra.mxu0 %v260
    %274 = vmatprep.subr.bf16.mxu0 0
    %275 = vmatpush1.bf16.msra.mxu0 %v259
    %276 = vmatprep.subr.bf16.mxu0 0
    %277 = vmatpush1.bf16.msra.mxu0 %v258
    %278 = vmatprep.subr.bf16.mxu0 0
    %279 = vmatpush1.bf16.msra.mxu0 %v257
    %280 = vmatprep.subr.bf16.mxu0 0
    %281 = vmatpush1.bf16.msra.mxu0 %v256
    %282 = vmatprep.subr.bf16.mxu0 0
    %283 = vmatpush1.bf16.msra.mxu0 %v255
    %284 = vmatprep.subr.bf16.mxu0 0
    %285 = vmatpush1.bf16.msra.mxu0 %v254
    %286 = vmatprep.subr.bf16.mxu0 0
    %287 = vmatpush2.bf16.msra.mxu0 0
    %288 = vmatprep.subr.bf16.mxu0 0
    %289 = vmatpush2.bf16.msra.mxu0 0
    %290 = vmatprep.subr.bf16.mxu0 0
    %291 = vmatpush2.bf16.msra.mxu0 0
    %292 = vmatprep.subr.bf16.mxu0 0
    %293 = vmatpush2.bf16.msra.mxu0 0
    %294 = vmatprep.subr.bf16.mxu0 0
    %295 = vmatpush2.bf16.msra.mxu0 0
    %296 = vmatprep.subr.bf16.mxu0 0
    %297 = vmatpush2.bf16.msra.mxu0 0
    %298 = vmatprep.subr.bf16.mxu0 0
    %299 = vmatpush2.bf16.msra.mxu0 0
    %300 = vmatprep.subr.bf16.mxu0 0
    %301 = vmatpush2.bf16.msra.mxu0 0
    %302 = vmatprep.mubr.bf16.mxu0 0
    %303 = vmatmul.mubr.bf16.gmra.mxu0 %v201
    %v304 = vpop.f32.mrf.mxu0
    %v305 = vadd.f32 %v221, %v304
    %v306 = vpop.f32.mrf.mxu0
    %v307 = vpop.f32.mrf.mxu0
    %v308 = vadd.f32 %v221, %v307
    %v309 = vpop.f32.mrf.mxu0
    %310 = vdwg.mxu0
    %v311 = vmax.f32 %v305, 0.0
    %v312 = vmax.f32 %v308, 0.0
    %v313 = vpack.c.bf16 %v312, %v311
    %v314 = vld [vmem:[#allocation8] sm:$0xf]
    %v315 = vld [vmem:[#allocation8 + $0x4] sm:$0xf]
    %v316 = vld [vmem:[#allocation8 + $0x8] sm:$0xf]
    %v317 = vld [vmem:[#allocation8 + $0xc] sm:$0xf]
    %v318 = vld [vmem:[#allocation8 + $0x10] sm:$0xf]
    %v319 = vld [vmem:[#allocation8 + $0x14] sm:$0xf]
    %v320 = vld [vmem:[#allocation8 + $0x18] sm:$0xf]
    %v321 = vld [vmem:[#allocation8 + $0x1c] sm:$0xf]
    %v322 = vld [vmem:[#allocation8 + $0x20] sm:$0xf]
    %v323 = vld [vmem:[#allocation8 + $0x24] sm:$0xf]
    %v324 = vld [vmem:[#allocation8 + $0x28] sm:$0xf]
    %v325 = vld [vmem:[#allocation8 + $0x2c] sm:$0xf]
    %v326 = vld [vmem:[#allocation8 + $0x30] sm:$0xf]
    %v327 = vld [vmem:[#allocation8 + $0x34] sm:$0xf]
    %v328 = vld [vmem:[#allocation8 + $0x38] sm:$0xf]
    %v329 = vld [vmem:[#allocation8 + $0x3c] sm:$0xf]
    %v330 = vlaneseq
    %v331 = vshrl.u32 %v330, 7
    %v332 = vsub.s32 2, %v331
    %v333 = vrot.slane %v91, %v332
    %v350 = vunpack.c.l.b16 %v314
    %v351 = vunpack.c.l.b16 %v315
    %v352 = vunpack.c.l.b16 %v316
    %v353 = vunpack.c.l.b16 %v317
    %v354 = vunpack.c.l.b16 %v318
    %v355 = vunpack.c.l.b16 %v319
    %v356 = vunpack.c.l.b16 %v320
    %v357 = vunpack.c.l.b16 %v321
    %v358 = vunpack.c.l.b16 %v322
    %v359 = vunpack.c.l.b16 %v323
    %v360 = vunpack.c.l.b16 %v324
    %v361 = vunpack.c.l.b16 %v325
    %v362 = vunpack.c.l.b16 %v326
    %v363 = vunpack.c.l.b16 %v327
    %v364 = vunpack.c.l.b16 %v328
    %v365 = vunpack.c.l.b16 %v329
    %v366 = vpack.c.b16 %v351, %v350
    %v367 = vpack.c.b16 %v353, %v352
    %v368 = vpack.c.b16 %v355, %v354
    %v369 = vpack.c.b16 %v357, %v356
    %v370 = vpack.c.b16 %v359, %v358
    %v371 = vpack.c.b16 %v361, %v360
    %v372 = vpack.c.b16 %v363, %v362
    %v373 = vpack.c.b16 %v365, %v364
    %382 = vmatprep.subr.bf16.mxu0 0
    %383 = vmatpush1.bf16.msra.mxu0 %v373
    %384 = vmatprep.subr.bf16.mxu0 0
    %385 = vmatpush1.bf16.msra.mxu0 %v372
    %386 = vmatprep.subr.bf16.mxu0 0
    %387 = vmatpush1.bf16.msra.mxu0 %v371
    %388 = vmatprep.subr.bf16.mxu0 0
    %389 = vmatpush1.bf16.msra.mxu0 %v370
    %390 = vmatprep.subr.bf16.mxu0 0
    %391 = vmatpush1.bf16.msra.mxu0 %v369
    %392 = vmatprep.subr.bf16.mxu0 0
    %393 = vmatpush1.bf16.msra.mxu0 %v368
    %394 = vmatprep.subr.bf16.mxu0 0
    %395 = vmatpush1.bf16.msra.mxu0 %v367
    %396 = vmatprep.subr.bf16.mxu0 0
    %397 = vmatpush1.bf16.msra.mxu0 %v366
    %398 = vmatprep.subr.bf16.mxu0 0
    %399 = vmatpush2.bf16.msra.mxu0 0
    %400 = vmatprep.subr.bf16.mxu0 0
    %401 = vmatpush2.bf16.msra.mxu0 0
    %402 = vmatprep.subr.bf16.mxu0 0
    %403 = vmatpush2.bf16.msra.mxu0 0
    %404 = vmatprep.subr.bf16.mxu0 0
    %405 = vmatpush2.bf16.msra.mxu0 0
    %406 = vmatprep.subr.bf16.mxu0 0
    %407 = vmatpush2.bf16.msra.mxu0 0
    %408 = vmatprep.subr.bf16.mxu0 0
    %409 = vmatpush2.bf16.msra.mxu0 0
    %410 = vmatprep.subr.bf16.mxu0 0
    %411 = vmatpush2.bf16.msra.mxu0 0
    %412 = vmatprep.subr.bf16.mxu0 0
    %413 = vmatpush2.bf16.msra.mxu0 0
    %414 = vmatprep.mubr.bf16.mxu0 0
    %415 = vmatmul.mubr.bf16.gmra.mxu0 %v313
    %v416 = vpop.f32.mrf.mxu0
    %v417 = vadd.f32 %v333, %v416
    %v418 = vpop.f32.mrf.mxu0
    %v419 = vpop.f32.mrf.mxu0
    %v420 = vadd.f32 %v333, %v419
    %v421 = vpop.f32.mrf.mxu0
    %422 = vdwg.mxu0
    %423 = vadd.xlane.f32.xlu0 %v417
    %v424 = vpop.xlane.xlu0 %423
    %425 = vadd.xlane.f32.xlu0 %v420
    %v426 = vpop.xlane.xlu0 %425
    %v427 = vmul.f32 %v424, 0.03125
    %v428 = vmul.f32 %v426, 0.03125
    %v429 = vsub.f32 %v417, %v427
    %v430 = vsub.f32 %v420, %v428
    %v431 = vlaneseq
    %v432 = vand.u32 %v431, 127
    %vm433 = vcmp.lt.s32.totalorder %v432, 32
    %v434 = vsel %vm433, 1, 0
    %vm435 = vcmp.eq.s32.totalorder %v434, 1
    %v436 = vsel %vm435, %v429, 0.0
    %v437 = vsel %vm435, %v430, 0.0
    %v438 = vmul.f32 %v436, %v436
    %v439 = vmul.f32 %v437, %v437
    %440 = vadd.xlane.f32.xlu0 %v438
    %v441 = vpop.xlane.xlu0 %440
    %442 = vadd.xlane.f32.xlu0 %v439
    %v443 = vpop.xlane.xlu0 %442
    %v444 = vmul.f32 %v441, 0.03125
    %v445 = vmul.f32 %v443, 0.03125
    %v446 = vadd.f32 %v444, 1e-05
    %v447 = vadd.f32 %v445, 1e-05
    %v448 = vrsqrt.pop %v446
    %v449 = vrsqrt.pop %v447
    %v450 = vmul.f32 %v436, %v448
    %v451 = vmul.f32 %v437, %v449
    %v452 = vlaneseq
    %v453 = vshrl.u32 %v452, 7
    %v454 = vsub.s32 3, %v453
    %v455 = vrot.slane %v91, %v454
    %v456 = vmul.f32 %v450, %v455
    %v457 = vmul.f32 %v451, %v455
    %v458 = vlaneseq
    %v459 = vshrl.u32 %v458, 7
    %v460 = vsub.s32 4, %v459
    %v461 = vrot.slane %v91, %v460
    %v462 = vadd.f32 %v456, %v461
    %v463 = vadd.f32 %v457, %v461
    %464 = vst [vmem:[#allocation11] sm:$0xff] %v462
    %465 = vst [vmem:[#allocation11 + $0x8] sm:$0xff] %v463
    // Predicated region
    $region42: #{tpu_custom_call.1} parent=1 // pred_check
      _
    $region43: #{tpu_custom_call.1} parent=1 // pred_check_branch
      %467 = sbr.rel (0) target = $region45
    $region44: #{tpu_custom_call.1} parent=1 // pred_region
      %s469 = ssub.s32 256, 256
      %470 = vsyncadd [#allocation4], %s469
      %s471 = sshll.u32 [#allocation11], 4
      %s472 = int_to_ptr.vmem [resolvable:$true] %s471
      %477 = dma.vmem_to_hbm [thread:$0]  %s472, 256, %s5, [#allocation4], 128, 128, 8
    $region45: #{tpu_custom_call.1} parent=1 // pred_fallthru
      _
    // Predicated region
    $region46: #{tpu_custom_call.1} parent=1 // pred_check
      _
    $region47: #{tpu_custom_call.1} parent=1 // pred_check_branch
      %479 = sbr.rel (0) target = $region49
    $region48: #{tpu_custom_call.1} parent=1 // pred_region
      %480 = dma.done [#allocation4], 256
    $region49: #{tpu_custom_call.1} parent=1 // pred_fallthru
      _
    %481 = vsyncpa [#allocation3], 1
    %482 = vsyncpa [#allocation6], 1
    %483 = vsyncpa [#allocation9], 1
    %484 = vsyncpa [#allocation4], 1

</llo_original>
